<compile_context>
chip_gen: v7x
topology: tpu7x:2x2x1
jax: 0.10.0
libtpu: 0.0.40
codegen_flags: <defaults>
</compile_context>

<pallas_src>
import jax
import jax.numpy as jnp
from jax.experimental import pallas as pl
from jax.experimental.pallas import tpu as pltpu


def _round_up(x, m):
    return ((x + m - 1) // m) * m


def _uncertainty_kernel(h_ref, w1_ref, b1_ref, w2_ref, b2_ref, o_ref):
    # z1 = h @ w1 + b1 ; a1 = relu(z1)      -- MXU (bf16 operands, f32 accumulate)
    x = h_ref[...].astype(jnp.bfloat16)                      # free VPU cast
    z1 = jnp.dot(x, w1_ref[...], preferred_element_type=jnp.float32) + b1_ref[...]
    a1 = jnp.maximum(z1, 0.0)

    # hidden -> 1 projection on the VPU/XLU (an N=1 MXU matmul would waste the array):
    # broadcast-multiply by the weight row, reduce across lanes.  Result: [tile_b].
    z2 = jnp.sum(a1 * w2_ref[...], axis=-1) + b2_ref[0]

    # numerically stable softplus: max(x,0) + log1p(exp(-|x|))   (EUP, f32)
    sp = jnp.maximum(z2, 0.0) + jnp.log1p(jnp.exp(-jnp.abs(z2)))

    # Lane-dense store: one [1, 1, tile_b] row per batch tile.
    o_ref[...] = sp.reshape(o_ref.shape).astype(o_ref.dtype)


def uncertainty_head(h, w1, b1, w2, b2, *, tile_b=None):
    """h: [B, in_dim] f32; w1: [in_dim, hidden]; b1: [hidden]; w2: [hidden, 1]; b2: [1].
    Returns sigma_u: [B, 1] f32 (>= 0). Matches Linear->ReLU->Linear->Softplus."""
    B, in_dim = h.shape
    hidden = w1.shape[1]
    assert w1.shape == (in_dim, hidden)
    assert w2.shape == (hidden, 1)

    # Batch tile: 128-granular, >= 2 tiles when B > 128 (so the "parallel" batch
    # axis spans both v7x TensorCores), capped so an f32 h tile stays ~<= 8 MiB
    # per pipeline buffer even at in_dim=4096.
    if tile_b is None:
        if B <= 128:
            tile_b = B                                   # single full-array block
        else:
            vmem_budget_per_buf = 8 * 1024 * 1024
            tile_cap = max(128, min(1024, (vmem_budget_per_buf // (in_dim * 4)) // 128 * 128))
            tile_b = min(tile_cap, _round_up(pl.cdiv(B, 2), 128))
    grid_b = pl.cdiv(B, tile_b)                          # ragged last block handled by Pallas

    w1_bf = w1.astype(jnp.bfloat16)       # MXU-side weights in bf16 (half the DMA / VMEM)
    b1_row = b1.reshape(1, hidden).astype(jnp.float32)
    w2_row = w2.reshape(1, hidden).astype(jnp.float32)   # hidden->1 weights as a lane-wide row
    b2_s = b2.reshape(1).astype(jnp.float32)             # scalar bias -> SMEM

    flops = 2 * grid_b * tile_b * in_dim * hidden + 3 * grid_b * tile_b * hidden
    bytes_accessed = (B * in_dim * 4            # h (f32 in HBM, cast in vregs)
                      + in_dim * hidden * 2     # w1 (bf16)
                      + 2 * hidden * 4 + 4      # b1, w2 row, b2
                      + grid_b * tile_b * 4)    # output

    resident = dict(pipeline_mode=pl.Buffered(1))  # constant-index blocks: single buffer

    out = pl.pallas_call(
        _uncertainty_kernel,
        out_shape=jax.ShapeDtypeStruct((grid_b, 1, tile_b), jnp.float32),
        grid=(grid_b,),
        in_specs=[
            pl.BlockSpec((tile_b, in_dim), lambda i: (i, 0)),            # h: streamed per tile
            pl.BlockSpec((in_dim, hidden), lambda i: (0, 0), **resident),  # w1: VMEM-resident
            pl.BlockSpec((1, hidden), lambda i: (0, 0), **resident),       # b1: VMEM-resident
            pl.BlockSpec((1, hidden), lambda i: (0, 0), **resident),       # w2 row: resident
            pl.BlockSpec(memory_space=pltpu.MemorySpace.SMEM),             # b2: scalar in SMEM
        ],
        out_specs=pl.BlockSpec((1, 1, tile_b), lambda i: (i, 0, 0)),       # lane-dense rows
        compiler_params=pltpu.CompilerParams(
            dimension_semantics=("parallel",),   # v7x: shard batch tiles across TCs
        ),
        cost_estimate=pl.CostEstimate(
            flops=flops, transcendentals=2 * grid_b * tile_b, bytes_accessed=bytes_accessed),
    )(h, w1_bf, b1_row, w2_row, b2_s)

    # Tiny output: reshape lane-dense tiles back to a [B, 1] column.
    return out.reshape(grid_b * tile_b, 1)[:B]


def _reference(h, w1, b1, w2, b2):
    z1 = jnp.maximum(h @ w1 + b1, 0.0)
    z2 = z1 @ w2 + b2
    return jnp.logaddexp(z2, 0.0)


if __name__ == "__main__":
    # Small shapes consistent with the module: hidden=512 as in __init__, modest in_dim.
    B, IN_DIM, HIDDEN = 20, 256, 512

    key = jax.random.PRNGKey(0)
    k_h, k_w1, k_b1, k_w2, k_b2, k_h2 = jax.random.split(key, 6)

    h = jax.random.normal(k_h, (B, IN_DIM), dtype=jnp.float32)
    # Deterministic synthetic parameters (fan-in scaled uniform, like torch Linear defaults).
    lim1 = 1.0 / jnp.sqrt(IN_DIM)
    w1 = jax.random.uniform(k_w1, (IN_DIM, HIDDEN), jnp.float32, -lim1, lim1)
    b1 = jax.random.uniform(k_b1, (HIDDEN,), jnp.float32, -lim1, lim1)
    lim2 = 1.0 / jnp.sqrt(HIDDEN)
    w2 = jax.random.uniform(k_w2, (HIDDEN, 1), jnp.float32, -lim2, lim2)
    b2 = jax.random.uniform(k_b2, (1,), jnp.float32, -lim2, lim2)

    ref = _reference(h, w1, b1, w2, b2)

    # bf16 MXU operands -> compare against f32 reference with relaxed tolerance.
    TOL = dict(atol=2e-2, rtol=2e-2)

    # Default tiling (single full-array block for this small B).
    out = jax.block_until_ready(uncertainty_head(h, w1, b1, w2, b2))
    assert out.shape == (B, 1)
    assert bool(jnp.all(out >= 0.0))
    assert jnp.allclose(out, ref, **TOL)

    # Multi-step batch grid path (tile_b=8 -> 3 grid steps, ragged last block).
    out2 = jax.block_until_ready(uncertainty_head(h, w1, b1, w2, b2, tile_b=8))
    assert out2.shape == (B, 1)
    assert jnp.allclose(out2, ref, **TOL)

    # Larger batch: exercises the default multi-tile heuristic (>=2 parallel tiles)
    # and the ragged last block without any wrapper-side padding of h.
    B2 = 300
    h2 = jax.random.normal(k_h2, (B2, IN_DIM), dtype=jnp.float32)
    ref2 = _reference(h2, w1, b1, w2, b2)
    out3 = jax.block_until_ready(uncertainty_head(h2, w1, b1, w2, b2))
    assert out3.shape == (B2, 1)
    assert jnp.allclose(out3, ref2, **TOL)

    print("KERNEL_OK")
</pallas_src>

<mosaic_0001>
module attributes {stable_mosaic.version = 11 : i64} {
  func.func @_uncertainty_kernel(%arg0: i32, %arg1: memref<20x256xf32, #tpu.memory_space<vmem>>, %arg2: memref<256x512xbf16, #tpu.memory_space<vmem>>, %arg3: memref<1x512xf32, #tpu.memory_space<vmem>>, %arg4: memref<1x512xf32, #tpu.memory_space<vmem>>, %arg5: memref<1xf32, #tpu.memory_space<smem>>, %arg6: memref<1x1x20xf32, #tpu.memory_space<vmem>>) attributes {dimension_semantics = [#tpu.dimension_semantics<parallel>], iteration_bounds = array<i64: 1>, scalar_prefetch = 0 : i64, scratch_operands = 0 : i64, tpu.core_type = #tpu.core_type<tc>, window_params = [{transform_indices = @transform_0, window_bounds = array<i64: 20, 256>}, {pipeline_mode = #tpu.pipeline_mode<synchronous>, transform_indices = @transform_1, window_bounds = array<i64: 256, 512>}, {pipeline_mode = #tpu.pipeline_mode<synchronous>, transform_indices = @transform_2, window_bounds = array<i64: 1, 512>}, {pipeline_mode = #tpu.pipeline_mode<synchronous>, transform_indices = @transform_3, window_bounds = array<i64: 1, 512>}, {transform_indices = @transform_4, window_bounds = array<i64: 1>}, {transform_indices = @transform_5, window_bounds = array<i64: 1, 1, 20>}]} {
    %c0 = arith.constant 0 : index
    %c0_0 = arith.constant 0 : index
    %0 = vector.load %arg1[%c0, %c0_0] : memref<20x256xf32, #tpu.memory_space<vmem>>, vector<20x256xf32>
    %1 = arith.truncf %0 : vector<20x256xf32> to vector<20x256xbf16>
    %c0_1 = arith.constant 0 : index
    %c0_2 = arith.constant 0 : index
    %2 = vector.load %arg2[%c0_1, %c0_2] : memref<256x512xbf16, #tpu.memory_space<vmem>>, vector<256x512xbf16>
    %cst = arith.constant dense<0.000000e+00> : vector<20x512xf32>
    %3 = tpu.matmul %1, %2, %cst {dimension_numbers = #tpu.dot_dimension_numbers<[1], [0], [0], [1], [0, 0, 1, 1], [], []>} : vector<20x256xbf16>, vector<256x512xbf16>, vector<20x512xf32> -> vector<20x512xf32>
    %c0_3 = arith.constant 0 : index
    %c0_4 = arith.constant 0 : index
    %4 = vector.load %arg3[%c0_3, %c0_4] : memref<1x512xf32, #tpu.memory_space<vmem>>, vector<1x512xf32>
    %5 = vector.broadcast %4 : vector<1x512xf32> to vector<20x512xf32>
    %6 = arith.addf %3, %5 : vector<20x512xf32>
    %cst_5 = arith.constant 0.000000e+00 : f32
    %7 = vector.broadcast %cst_5 : f32 to vector<20x512xf32>
    %8 = arith.maximumf %6, %7 : vector<20x512xf32>
    %c0_6 = arith.constant 0 : index
    %c0_7 = arith.constant 0 : index
    %9 = vector.load %arg4[%c0_6, %c0_7] : memref<1x512xf32, #tpu.memory_space<vmem>>, vector<1x512xf32>
    %10 = vector.broadcast %9 : vector<1x512xf32> to vector<20x512xf32>
    %11 = arith.mulf %8, %10 : vector<20x512xf32>
    %cst_8 = arith.constant dense<0.000000e+00> : vector<20xf32>
    %12 = vector.multi_reduction <add>, %11, %cst_8 [1] : vector<20x512xf32> to vector<20xf32>
    %c0_9 = arith.constant 0 : index
    %13 = memref.load %arg5[%c0_9] : memref<1xf32, #tpu.memory_space<smem>>
    %14 = vector.broadcast %13 : f32 to vector<20xf32>
    %15 = arith.addf %12, %14 : vector<20xf32>
    %cst_10 = arith.constant 0.000000e+00 : f32
    %16 = vector.broadcast %cst_10 : f32 to vector<20xf32>
    %17 = arith.maximumf %15, %16 : vector<20xf32>
    %18 = math.absf %15 : vector<20xf32>
    %cst_11 = arith.constant 0.000000e+00 : f32
    %19 = vector.broadcast %cst_11 : f32 to vector<20xf32>
    %20 = arith.subf %19, %18 : vector<20xf32>
    %21 = math.exp %20 : vector<20xf32>
    %22 = math.log1p %21 : vector<20xf32>
    %23 = arith.addf %17, %22 : vector<20xf32>
    %24 = vector.shape_cast %23 : vector<20xf32> to vector<1x1x20xf32>
    %c0_12 = arith.constant 0 : index
    %c0_13 = arith.constant 0 : index
    %c0_14 = arith.constant 0 : index
    %25 = vector.load %arg6[%c0_12, %c0_13, %c0_14] : memref<1x1x20xf32, #tpu.memory_space<vmem>>, vector<1x1x20xf32>
    tpu.vector_store %arg6[%c0_12, %c0_13, %c0_14], %24 {strides = array<i32>} : memref<1x1x20xf32, #tpu.memory_space<vmem>>, vector<1x1x20xf32>,
    return
  }
  func.func @transform_0(%arg0: i32) -> (i32, i32) {
    %c0_i32 = arith.constant 0 : i32
    %c0_i32_0 = arith.constant 0 : i32
    return %arg0, %c0_i32 : i32, i32
  }
  func.func @transform_1(%arg0: i32) -> (i32, i32) {
    %c0_i32 = arith.constant 0 : i32
    %c0_i32_0 = arith.constant 0 : i32
    %c0_i32_1 = arith.constant 0 : i32
    return %c0_i32, %c0_i32_0 : i32, i32
  }
  func.func @transform_2(%arg0: i32) -> (i32, i32) {
    %c0_i32 = arith.constant 0 : i32
    %c0_i32_0 = arith.constant 0 : i32
    %c0_i32_1 = arith.constant 0 : i32
    return %c0_i32, %c0_i32_0 : i32, i32
  }
  func.func @transform_3(%arg0: i32) -> (i32, i32) {
    %c0_i32 = arith.constant 0 : i32
    %c0_i32_0 = arith.constant 0 : i32
    %c0_i32_1 = arith.constant 0 : i32
    return %c0_i32, %c0_i32_0 : i32, i32
  }
  func.func @transform_4(%arg0: i32) -> i32 {
    %c0_i32 = arith.constant 0 : i32
    %c0_i32_0 = arith.constant 0 : i32
    return %c0_i32 : i32
  }
  func.func @transform_5(%arg0: i32) -> (i32, i32, i32) {
    %c0_i32 = arith.constant 0 : i32
    %c0_i32_0 = arith.constant 0 : i32
    %c0_i32_1 = arith.constant 0 : i32
    return %arg0, %c0_i32, %c0_i32_0 : i32, i32, i32
  }
}

</mosaic_0001>

<llo_original>
// kernel: tpu_custom_call.1
$region0: #{tpu_custom_call.1}
  #allocation0 [shape = 'u32[]', space=smem, size = 0x4, offset = 0x4, fixed_abs, tag = 'smem constant byte address 0x4 - core index']
  #allocation1 [shape = 'u32[144,128]{1,0:T(1,128)}', space=vmem, size = 0x12000, scoped, tag = 'internal scratch']
  #allocation2 [shape = 'f32[1]{0:T(128)S(6)}', space=smem, size = 0x200, scoped, tag = 'scoped memory for tpu_custom_call.1']
  %s0 = inlined_call_operand.hbm [shape: f32[20,256], index: 0, kind: input, shape index: {}]
  %s1 = inlined_call_operand.hbm [shape: bf16[256,512], index: 1, kind: input, shape index: {}]
  %s2 = inlined_call_operand.vmem [shape: f32[1,512], index: 2, kind: input, shape index: {}]
  %s3 = inlined_call_operand.vmem [shape: f32[1,512], index: 3, kind: input, shape index: {}]
  %s4 = inlined_call_operand.<no memory space> [shape: f32[1], index: 4, kind: input, shape index: {}]
  %s5 = inlined_call_operand.hbm [shape: f32[1,1,20], index: 5, kind: output, shape index: {}]
  %s6 = sld [smem:[#allocation0]]
  $region38: #{tpu_custom_call.1} parent=0
    _
  %s8 = ssub.s32 1, %s6
  %s9 = scalar_select 0, %s8, %s6
  %10 = sst [smem:[#allocation2]] %s4
  $region1: #{tpu_custom_call.1} parent=0
    #allocation3 [shape = 'u8[24576]{0}', space=vmem, size = 0x6000, scoped, tag = 'input window, operand 0, single buffered']
    #allocation4 [shape = 's32[1]{0}', space=sflag, size = 0x4, scoped, tag = 'scoped memory for tpu_custom_call.1']
    #allocation5 [shape = 's32[1]{0}', space=sflag, size = 0x4, scoped, tag = 'scoped memory for tpu_custom_call.1']
    #allocation6 [shape = 'u8[262144]{0}', space=vmem, size = 0x40000, scoped, tag = 'input window, operand 1, single buffered']
    #allocation7 [shape = 's32[1]{0}', space=sflag, size = 0x4, scoped, tag = 'scoped memory for tpu_custom_call.1']
    #allocation8 [shape = 'u8[512]{0}', space=vmem, size = 0x400, scoped, tag = 'output window, operand 0, single buffered']
    %11 = vsyncpa [#allocation4], 0
    %12 = vsyncpa [#allocation7], 0
    %13 = vsyncpa [#allocation5], 0
    // Predicated region
    $region2: #{tpu_custom_call.1} parent=1 // pred_check
      _
    $region3: #{tpu_custom_call.1} parent=1 // pred_check_branch
      %15 = sbr.rel (0) target = $region5
    $region4: #{tpu_custom_call.1} parent=1 // pred_region
      %s17 = ssub.s32 768, 768
      %18 = vsyncadd [#allocation4], %s17
      %s19 = sshll.u32 [#allocation3], 4
      %s20 = int_to_ptr.vmem [resolvable:$true] %s19
      %25 = dma.hbm_to_vmem [thread:$0]  %s0, 768, %s20, [#allocation4], 256, 256, 16
    $region5: #{tpu_custom_call.1} parent=1 // pred_fallthru
      _
    // Predicated region
    $region6: #{tpu_custom_call.1} parent=1 // pred_check
      _
    $region7: #{tpu_custom_call.1} parent=1 // pred_check_branch
      %27 = sbr.rel (0) target = $region9
    $region8: #{tpu_custom_call.1} parent=1 // pred_region
      %s29 = ssub.s32 8192, 8192
      %30 = vsyncadd [#allocation7], %s29
      %s31 = sshll.u32 [#allocation6], 4
      %s32 = int_to_ptr.vmem [resolvable:$true] %s31
      %37 = dma.hbm_to_vmem [thread:$0]  %s1, 8192, %s32, [#allocation7], 256, 256, 16
    $region9: #{tpu_custom_call.1} parent=1 // pred_fallthru
      _
    // Predicated region
    $region10: #{tpu_custom_call.1} parent=1 // pred_check
      _
    $region11: #{tpu_custom_call.1} parent=1 // pred_check_branch
      %39 = sbr.rel (0) target = $region13
    $region12: #{tpu_custom_call.1} parent=1 // pred_region
      _
    $region13: #{tpu_custom_call.1} parent=1 // pred_fallthru
      _
    // Predicated region
    $region14: #{tpu_custom_call.1} parent=1 // pred_check
      _
    $region15: #{tpu_custom_call.1} parent=1 // pred_check_branch
      %41 = sbr.rel (0) target = $region17
    $region16: #{tpu_custom_call.1} parent=1 // pred_region
      _
    $region17: #{tpu_custom_call.1} parent=1 // pred_fallthru
      _
    // Predicated region
    $region18: #{tpu_custom_call.1} parent=1 // pred_check
      _
    $region19: #{tpu_custom_call.1} parent=1 // pred_check_branch
      %43 = sbr.rel (0) target = $region21
    $region20: #{tpu_custom_call.1} parent=1 // pred_region
      _
    $region21: #{tpu_custom_call.1} parent=1 // pred_fallthru
      _
    // Predicated region
    $region22: #{tpu_custom_call.1} parent=1 // pred_check
      _
    $region23: #{tpu_custom_call.1} parent=1 // pred_check_branch
      %45 = sbr.rel (0) target = $region25
    $region24: #{tpu_custom_call.1} parent=1 // pred_region
      %46 = dma.done [#allocation4], 768
    $region25: #{tpu_custom_call.1} parent=1 // pred_fallthru
      _
    // Predicated region
    $region26: #{tpu_custom_call.1} parent=1 // pred_check
      _
    $region27: #{tpu_custom_call.1} parent=1 // pred_check_branch
      %48 = sbr.rel (0) target = $region29
    $region28: #{tpu_custom_call.1} parent=1 // pred_region
      %49 = dma.done [#allocation7], 8192
    $region29: #{tpu_custom_call.1} parent=1 // pred_fallthru
      _
    %v50 = vld [vmem:[#allocation3] sm:$0xff]
    %v51 = vld [vmem:[#allocation3 + $0x8] sm:$0xff]
    %v52 = vld [vmem:[#allocation3 + $0x10] sm:$0xff]
    %v53 = vld [vmem:[#allocation3 + $0x18] sm:$0xff]
    %v54 = vld [vmem:[#allocation3 + $0x20] sm:$0xf]
    %v55 = vld [vmem:[#allocation3 + $0x28] sm:$0xf]
    %v56 = vpack.c.bf16 %v52, %v50
    %v57 = vpack.c.bf16 %v53, %v51
    %v58 = vpack.c.bf16 %v54, %v54
    %v59 = vpack.c.bf16 %v55, %v55
    %v60 = vld [vmem:[#allocation6] sm:$0xff]
    %v61 = vld [vmem:[#allocation6 + $0x8] sm:$0xff]
    %v62 = vld [vmem:[#allocation6 + $0x10] sm:$0xff]
    %v63 = vld [vmem:[#allocation6 + $0x18] sm:$0xff]
    %v64 = vld [vmem:[#allocation6 + $0x20] sm:$0xff]
    %v65 = vld [vmem:[#allocation6 + $0x28] sm:$0xff]
    %v66 = vld [vmem:[#allocation6 + $0x30] sm:$0xff]
    %v67 = vld [vmem:[#allocation6 + $0x38] sm:$0xff]
    %v68 = vld [vmem:[#allocation6 + $0x40] sm:$0xff]
    %v69 = vld [vmem:[#allocation6 + $0x48] sm:$0xff]
    %v70 = vld [vmem:[#allocation6 + $0x50] sm:$0xff]
    %v71 = vld [vmem:[#allocation6 + $0x58] sm:$0xff]
    %v72 = vld [vmem:[#allocation6 + $0x60] sm:$0xff]
    %v73 = vld [vmem:[#allocation6 + $0x68] sm:$0xff]
    %v74 = vld [vmem:[#allocation6 + $0x70] sm:$0xff]
    %v75 = vld [vmem:[#allocation6 + $0x78] sm:$0xff]
    %v76 = vld [vmem:[#allocation6 + $0x80] sm:$0xff]
    %v77 = vld [vmem:[#allocation6 + $0x88] sm:$0xff]
    %v78 = vld [vmem:[#allocation6 + $0x90] sm:$0xff]
    %v79 = vld [vmem:[#allocation6 + $0x98] sm:$0xff]
    %v80 = vld [vmem:[#allocation6 + $0xa0] sm:$0xff]
    %v81 = vld [vmem:[#allocation6 + $0xa8] sm:$0xff]
    %v82 = vld [vmem:[#allocation6 + $0xb0] sm:$0xff]
    %v83 = vld [vmem:[#allocation6 + $0xb8] sm:$0xff]
    %v84 = vld [vmem:[#allocation6 + $0xc0] sm:$0xff]
    %v85 = vld [vmem:[#allocation6 + $0xc8] sm:$0xff]
    %v86 = vld [vmem:[#allocation6 + $0xd0] sm:$0xff]
    %v87 = vld [vmem:[#allocation6 + $0xd8] sm:$0xff]
    %v88 = vld [vmem:[#allocation6 + $0xe0] sm:$0xff]
    %v89 = vld [vmem:[#allocation6 + $0xe8] sm:$0xff]
    %v90 = vld [vmem:[#allocation6 + $0xf0] sm:$0xff]
    %v91 = vld [vmem:[#allocation6 + $0xf8] sm:$0xff]
    %v92 = vld [vmem:[#allocation6 + $0x100] sm:$0xff]
    %v93 = vld [vmem:[#allocation6 + $0x108] sm:$0xff]
    %v94 = vld [vmem:[#allocation6 + $0x110] sm:$0xff]
    %v95 = vld [vmem:[#allocation6 + $0x118] sm:$0xff]
    %v96 = vld [vmem:[#allocation6 + $0x120] sm:$0xff]
    %v97 = vld [vmem:[#allocation6 + $0x128] sm:$0xff]
    %v98 = vld [vmem:[#allocation6 + $0x130] sm:$0xff]
    %v99 = vld [vmem:[#allocation6 + $0x138] sm:$0xff]
    %v100 = vld [vmem:[#allocation6 + $0x140] sm:$0xff]
    %v101 = vld [vmem:[#allocation6 + $0x148] sm:$0xff]
    %v102 = vld [vmem:[#allocation6 + $0x150] sm:$0xff]
    %v103 = vld [vmem:[#allocation6 + $0x158] sm:$0xff]
    %v104 = vld [vmem:[#allocation6 + $0x160] sm:$0xff]
    %v105 = vld [vmem:[#allocation6 + $0x168] sm:$0xff]
    %v106 = vld [vmem:[#allocation6 + $0x170] sm:$0xff]
    %v107 = vld [vmem:[#allocation6 + $0x178] sm:$0xff]
    %v108 = vld [vmem:[#allocation6 + $0x180] sm:$0xff]
    %v109 = vld [vmem:[#allocation6 + $0x188] sm:$0xff]
    %v110 = vld [vmem:[#allocation6 + $0x190] sm:$0xff]
    %v111 = vld [vmem:[#allocation6 + $0x198] sm:$0xff]
    %v112 = vld [vmem:[#allocation6 + $0x1a0] sm:$0xff]
    %v113 = vld [vmem:[#allocation6 + $0x1a8] sm:$0xff]
    %v114 = vld [vmem:[#allocation6 + $0x1b0] sm:$0xff]
    %v115 = vld [vmem:[#allocation6 + $0x1b8] sm:$0xff]
    %v116 = vld [vmem:[#allocation6 + $0x1c0] sm:$0xff]
    %v117 = vld [vmem:[#allocation6 + $0x1c8] sm:$0xff]
    %v118 = vld [vmem:[#allocation6 + $0x1d0] sm:$0xff]
    %v119 = vld [vmem:[#allocation6 + $0x1d8] sm:$0xff]
    %v120 = vld [vmem:[#allocation6 + $0x1e0] sm:$0xff]
    %v121 = vld [vmem:[#allocation6 + $0x1e8] sm:$0xff]
    %v122 = vld [vmem:[#allocation6 + $0x1f0] sm:$0xff]
    %v123 = vld [vmem:[#allocation6 + $0x1f8] sm:$0xff]
    %v124 = vld [vmem:[%s2] sm:$0xf]
    %v126 = vlaneseq
    %v127 = vshrl.u32 %v126, 7
    %v128 = vsub.s32 0, %v127
    %v129 = vrot.slane %v124, %v128
    %v130 = vlaneseq
    %v131 = vshrl.u32 %v130, 7
    %v132 = vsub.s32 1, %v131
    %v133 = vrot.slane %v124, %v132
    %v134 = vlaneseq
    %v135 = vshrl.u32 %v134, 7
    %v136 = vsub.s32 2, %v135
    %v137 = vrot.slane %v124, %v136
    %v138 = vlaneseq
    %v139 = vshrl.u32 %v138, 7
    %v140 = vsub.s32 3, %v139
    %v141 = vrot.slane %v124, %v140
    %v210 = vunpack.c.l.b16 %v60
    %v211 = vunpack.c.h.b16 %v60
    %v212 = vunpack.c.l.b16 %v61
    %v213 = vunpack.c.h.b16 %v61
    %v214 = vunpack.c.l.b16 %v62
    %v215 = vunpack.c.h.b16 %v62
    %v216 = vunpack.c.l.b16 %v63
    %v217 = vunpack.c.h.b16 %v63
    %v218 = vunpack.c.l.b16 %v64
    %v219 = vunpack.c.h.b16 %v64
    %v220 = vunpack.c.l.b16 %v65
    %v221 = vunpack.c.h.b16 %v65
    %v222 = vunpack.c.l.b16 %v66
    %v223 = vunpack.c.h.b16 %v66
    %v224 = vunpack.c.l.b16 %v67
    %v225 = vunpack.c.h.b16 %v67
    %v226 = vunpack.c.l.b16 %v68
    %v227 = vunpack.c.h.b16 %v68
    %v228 = vunpack.c.l.b16 %v69
    %v229 = vunpack.c.h.b16 %v69
    %v230 = vunpack.c.l.b16 %v70
    %v231 = vunpack.c.h.b16 %v70
    %v232 = vunpack.c.l.b16 %v71
    %v233 = vunpack.c.h.b16 %v71
    %v234 = vunpack.c.l.b16 %v72
    %v235 = vunpack.c.h.b16 %v72
    %v236 = vunpack.c.l.b16 %v73
    %v237 = vunpack.c.h.b16 %v73
    %v238 = vunpack.c.l.b16 %v74
    %v239 = vunpack.c.h.b16 %v74
    %v240 = vunpack.c.l.b16 %v75
    %v241 = vunpack.c.h.b16 %v75
    %v242 = vunpack.c.l.b16 %v76
    %v243 = vunpack.c.h.b16 %v76
    %v244 = vunpack.c.l.b16 %v77
    %v245 = vunpack.c.h.b16 %v77
    %v246 = vunpack.c.l.b16 %v78
    %v247 = vunpack.c.h.b16 %v78
    %v248 = vunpack.c.l.b16 %v79
    %v249 = vunpack.c.h.b16 %v79
    %v250 = vunpack.c.l.b16 %v80
    %v251 = vunpack.c.h.b16 %v80
    %v252 = vunpack.c.l.b16 %v81
    %v253 = vunpack.c.h.b16 %v81
    %v254 = vunpack.c.l.b16 %v82
    %v255 = vunpack.c.h.b16 %v82
    %v256 = vunpack.c.l.b16 %v83
    %v257 = vunpack.c.h.b16 %v83
    %v258 = vunpack.c.l.b16 %v84
    %v259 = vunpack.c.h.b16 %v84
    %v260 = vunpack.c.l.b16 %v85
    %v261 = vunpack.c.h.b16 %v85
    %v262 = vunpack.c.l.b16 %v86
    %v263 = vunpack.c.h.b16 %v86
    %v264 = vunpack.c.l.b16 %v87
    %v265 = vunpack.c.h.b16 %v87
    %v266 = vunpack.c.l.b16 %v88
    %v267 = vunpack.c.h.b16 %v88
    %v268 = vunpack.c.l.b16 %v89
    %v269 = vunpack.c.h.b16 %v89
    %v270 = vunpack.c.l.b16 %v90
    %v271 = vunpack.c.h.b16 %v90
    %v272 = vunpack.c.l.b16 %v91
    %v273 = vunpack.c.h.b16 %v91
    %v274 = vunpack.c.l.b16 %v92
    %v275 = vunpack.c.h.b16 %v92
    %v276 = vunpack.c.l.b16 %v93
    %v277 = vunpack.c.h.b16 %v93
    %v278 = vunpack.c.l.b16 %v94
    %v279 = vunpack.c.h.b16 %v94
    %v280 = vunpack.c.l.b16 %v95
    %v281 = vunpack.c.h.b16 %v95
    %v282 = vunpack.c.l.b16 %v96
    %v283 = vunpack.c.h.b16 %v96
    %v284 = vunpack.c.l.b16 %v97
    %v285 = vunpack.c.h.b16 %v97
    %v286 = vunpack.c.l.b16 %v98
    %v287 = vunpack.c.h.b16 %v98
    %v288 = vunpack.c.l.b16 %v99
    %v289 = vunpack.c.h.b16 %v99
    %v290 = vunpack.c.l.b16 %v100
    %v291 = vunpack.c.h.b16 %v100
    %v292 = vunpack.c.l.b16 %v101
    %v293 = vunpack.c.h.b16 %v101
    %v294 = vunpack.c.l.b16 %v102
    %v295 = vunpack.c.h.b16 %v102
    %v296 = vunpack.c.l.b16 %v103
    %v297 = vunpack.c.h.b16 %v103
    %v298 = vunpack.c.l.b16 %v104
    %v299 = vunpack.c.h.b16 %v104
    %v300 = vunpack.c.l.b16 %v105
    %v301 = vunpack.c.h.b16 %v105
    %v302 = vunpack.c.l.b16 %v106
    %v303 = vunpack.c.h.b16 %v106
    %v304 = vunpack.c.l.b16 %v107
    %v305 = vunpack.c.h.b16 %v107
    %v306 = vunpack.c.l.b16 %v108
    %v307 = vunpack.c.h.b16 %v108
    %v308 = vunpack.c.l.b16 %v109
    %v309 = vunpack.c.h.b16 %v109
    %v310 = vunpack.c.l.b16 %v110
    %v311 = vunpack.c.h.b16 %v110
    %v312 = vunpack.c.l.b16 %v111
    %v313 = vunpack.c.h.b16 %v111
    %v314 = vunpack.c.l.b16 %v112
    %v315 = vunpack.c.h.b16 %v112
    %v316 = vunpack.c.l.b16 %v113
    %v317 = vunpack.c.h.b16 %v113
    %v318 = vunpack.c.l.b16 %v114
    %v319 = vunpack.c.h.b16 %v114
    %v320 = vunpack.c.l.b16 %v115
    %v321 = vunpack.c.h.b16 %v115
    %v322 = vunpack.c.l.b16 %v116
    %v323 = vunpack.c.h.b16 %v116
    %v324 = vunpack.c.l.b16 %v117
    %v325 = vunpack.c.h.b16 %v117
    %v326 = vunpack.c.l.b16 %v118
    %v327 = vunpack.c.h.b16 %v118
    %v328 = vunpack.c.l.b16 %v119
    %v329 = vunpack.c.h.b16 %v119
    %v330 = vunpack.c.l.b16 %v120
    %v331 = vunpack.c.h.b16 %v120
    %v332 = vunpack.c.l.b16 %v121
    %v333 = vunpack.c.h.b16 %v121
    %v334 = vunpack.c.l.b16 %v122
    %v335 = vunpack.c.h.b16 %v122
    %v336 = vunpack.c.l.b16 %v123
    %v337 = vunpack.c.h.b16 %v123
    %v338 = vpack.c.b16 %v214, %v210
    %v339 = vpack.c.b16 %v215, %v211
    %v340 = vpack.c.b16 %v216, %v212
    %v341 = vpack.c.b16 %v217, %v213
    %v342 = vpack.c.b16 %v222, %v218
    %v343 = vpack.c.b16 %v223, %v219
    %v344 = vpack.c.b16 %v224, %v220
    %v345 = vpack.c.b16 %v225, %v221
    %v346 = vpack.c.b16 %v230, %v226
    %v347 = vpack.c.b16 %v231, %v227
    %v348 = vpack.c.b16 %v232, %v228
    %v349 = vpack.c.b16 %v233, %v229
    %v350 = vpack.c.b16 %v238, %v234
    %v351 = vpack.c.b16 %v239, %v235
    %v352 = vpack.c.b16 %v240, %v236
    %v353 = vpack.c.b16 %v241, %v237
    %v354 = vpack.c.b16 %v246, %v242
    %v355 = vpack.c.b16 %v247, %v243
    %v356 = vpack.c.b16 %v248, %v244
    %v357 = vpack.c.b16 %v249, %v245
    %v358 = vpack.c.b16 %v254, %v250
    %v359 = vpack.c.b16 %v255, %v251
    %v360 = vpack.c.b16 %v256, %v252
    %v361 = vpack.c.b16 %v257, %v253
    %v362 = vpack.c.b16 %v262, %v258
    %v363 = vpack.c.b16 %v263, %v259
    %v364 = vpack.c.b16 %v264, %v260
    %v365 = vpack.c.b16 %v265, %v261
    %v366 = vpack.c.b16 %v270, %v266
    %v367 = vpack.c.b16 %v271, %v267
    %v368 = vpack.c.b16 %v272, %v268
    %v369 = vpack.c.b16 %v273, %v269
    %v370 = vpack.c.b16 %v278, %v274
    %v371 = vpack.c.b16 %v279, %v275
    %v372 = vpack.c.b16 %v280, %v276
    %v373 = vpack.c.b16 %v281, %v277
    %v374 = vpack.c.b16 %v286, %v282
    %v375 = vpack.c.b16 %v287, %v283
    %v376 = vpack.c.b16 %v288, %v284
    %v377 = vpack.c.b16 %v289, %v285
    %v378 = vpack.c.b16 %v294, %v290
    %v379 = vpack.c.b16 %v295, %v291
    %v380 = vpack.c.b16 %v296, %v292
    %v381 = vpack.c.b16 %v297, %v293
    %v382 = vpack.c.b16 %v302, %v298
    %v383 = vpack.c.b16 %v303, %v299
    %v384 = vpack.c.b16 %v304, %v300
    %v385 = vpack.c.b16 %v305, %v301
    %v386 = vpack.c.b16 %v310, %v306
    %v387 = vpack.c.b16 %v311, %v307
    %v388 = vpack.c.b16 %v312, %v308
    %v389 = vpack.c.b16 %v313, %v309
    %v390 = vpack.c.b16 %v318, %v314
    %v391 = vpack.c.b16 %v319, %v315
    %v392 = vpack.c.b16 %v320, %v316
    %v393 = vpack.c.b16 %v321, %v317
    %v394 = vpack.c.b16 %v326, %v322
    %v395 = vpack.c.b16 %v327, %v323
    %v396 = vpack.c.b16 %v328, %v324
    %v397 = vpack.c.b16 %v329, %v325
    %v398 = vpack.c.b16 %v334, %v330
    %v399 = vpack.c.b16 %v335, %v331
    %v400 = vpack.c.b16 %v336, %v332
    %v401 = vpack.c.b16 %v337, %v333
    %466 = vmatprep.subr.bf16.mxu0 %v339
    %467 = vmatpush1.bf16.msra.mxu0 %v338
    %468 = vmatprep.subr.bf16.mxu0 %v343
    %469 = vmatpush1.bf16.msra.mxu0 %v342
    %470 = vmatprep.subr.bf16.mxu0 %v347
    %471 = vmatpush1.bf16.msra.mxu0 %v346
    %472 = vmatprep.subr.bf16.mxu0 %v351
    %473 = vmatpush1.bf16.msra.mxu0 %v350
    %474 = vmatprep.subr.bf16.mxu0 %v355
    %475 = vmatpush1.bf16.msra.mxu0 %v354
    %476 = vmatprep.subr.bf16.mxu0 %v359
    %477 = vmatpush1.bf16.msra.mxu0 %v358
    %478 = vmatprep.subr.bf16.mxu0 %v363
    %479 = vmatpush1.bf16.msra.mxu0 %v362
    %480 = vmatprep.subr.bf16.mxu0 %v367
    %481 = vmatpush1.bf16.msra.mxu0 %v366
    %482 = vmatprep.subr.bf16.mxu0 %v371
    %483 = vmatpush1.bf16.msra.mxu0 %v370
    %484 = vmatprep.subr.bf16.mxu0 %v375
    %485 = vmatpush1.bf16.msra.mxu0 %v374
    %486 = vmatprep.subr.bf16.mxu0 %v379
    %487 = vmatpush1.bf16.msra.mxu0 %v378
    %488 = vmatprep.subr.bf16.mxu0 %v383
    %489 = vmatpush1.bf16.msra.mxu0 %v382
    %490 = vmatprep.subr.bf16.mxu0 %v387
    %491 = vmatpush1.bf16.msra.mxu0 %v386
    %492 = vmatprep.subr.bf16.mxu0 %v391
    %493 = vmatpush1.bf16.msra.mxu0 %v390
    %494 = vmatprep.subr.bf16.mxu0 %v395
    %495 = vmatpush1.bf16.msra.mxu0 %v394
    %496 = vmatprep.subr.bf16.mxu0 %v399
    %497 = vmatpush1.bf16.msra.mxu0 %v398
    %498 = vmatprep.mubr.bf16.mxu0 %v57
    %499 = vmatmul.mubr.bf16.gmra.mrb[0].mxu0 %v56
    %v500 = vpop.f32.mrb[0].mxu0
    %v501 = vadd.f32 %v129, %v500
    %v502 = vpop.f32.mrb[0].mxu0
    %v503 = vadd.f32 %v133, %v502
    %v504 = vpop.f32.mrb[0].mxu0
    %v505 = vadd.f32 %v129, %v504
    %v506 = vpop.f32.mrb[0].mxu0
    %v507 = vadd.f32 %v133, %v506
    %508 = vmatprep.mubr.bf16.mxu0 %v59
    %509 = vmatmul.mubr.bf16.gmra.mrb[0].mxu0 %v58
    %v510 = vpop.f32.mrb[0].mxu0
    %v511 = vadd.f32 %v129, %v510
    %v512 = vpop.f32.mrb[0].mxu0
    %v513 = vadd.f32 %v133, %v512
    %v514 = vpop.f32.mrb[0].mxu0
    %v515 = vpop.f32.mrb[0].mxu0
    %516 = vdwg.mxu0
    %517 = vmatprep.subr.bf16.mxu0 %v341
    %518 = vmatpush1.bf16.msra.mxu0 %v340
    %519 = vmatprep.subr.bf16.mxu0 %v345
    %520 = vmatpush1.bf16.msra.mxu0 %v344
    %521 = vmatprep.subr.bf16.mxu0 %v349
    %522 = vmatpush1.bf16.msra.mxu0 %v348
    %523 = vmatprep.subr.bf16.mxu0 %v353
    %524 = vmatpush1.bf16.msra.mxu0 %v352
    %525 = vmatprep.subr.bf16.mxu0 %v357
    %526 = vmatpush1.bf16.msra.mxu0 %v356
    %527 = vmatprep.subr.bf16.mxu0 %v361
    %528 = vmatpush1.bf16.msra.mxu0 %v360
    %529 = vmatprep.subr.bf16.mxu0 %v365
    %530 = vmatpush1.bf16.msra.mxu0 %v364
    %531 = vmatprep.subr.bf16.mxu0 %v369
    %532 = vmatpush1.bf16.msra.mxu0 %v368
    %533 = vmatprep.subr.bf16.mxu0 %v373
    %534 = vmatpush1.bf16.msra.mxu0 %v372
    %535 = vmatprep.subr.bf16.mxu0 %v377
    %536 = vmatpush1.bf16.msra.mxu0 %v376
    %537 = vmatprep.subr.bf16.mxu0 %v381
    %538 = vmatpush1.bf16.msra.mxu0 %v380
    %539 = vmatprep.subr.bf16.mxu0 %v385
    %540 = vmatpush1.bf16.msra.mxu0 %v384
    %541 = vmatprep.subr.bf16.mxu0 %v389
    %542 = vmatpush1.bf16.msra.mxu0 %v388
    %543 = vmatprep.subr.bf16.mxu0 %v393
    %544 = vmatpush1.bf16.msra.mxu0 %v392
    %545 = vmatprep.subr.bf16.mxu0 %v397
    %546 = vmatpush1.bf16.msra.mxu0 %v396
    %547 = vmatprep.subr.bf16.mxu0 %v401
    %548 = vmatpush1.bf16.msra.mxu0 %v400
    %549 = vmatprep.mubr.bf16.mxu0 %v57
    %550 = vmatmul.mubr.bf16.gmra.mrb[0].mxu0 %v56
    %v551 = vpop.f32.mrb[0].mxu0
    %v552 = vadd.f32 %v137, %v551
    %v553 = vpop.f32.mrb[0].mxu0
    %v554 = vadd.f32 %v141, %v553
    %v555 = vpop.f32.mrb[0].mxu0
    %v556 = vadd.f32 %v137, %v555
    %v557 = vpop.f32.mrb[0].mxu0
    %v558 = vadd.f32 %v141, %v557
    %559 = vmatprep.mubr.bf16.mxu0 %v59
    %560 = vmatmul.mubr.bf16.gmra.mrb[0].mxu0 %v58
    %v561 = vpop.f32.mrb[0].mxu0
    %v562 = vadd.f32 %v137, %v561
    %v563 = vpop.f32.mrb[0].mxu0
    %v564 = vadd.f32 %v141, %v563
    %v565 = vpop.f32.mrb[0].mxu0
    %v566 = vpop.f32.mrb[0].mxu0
    %567 = vdwg.mxu0
    %v568 = vmax.f32 %v501, 0.0
    %v569 = vmax.f32 %v503, 0.0
    %v570 = vmax.f32 %v552, 0.0
    %v571 = vmax.f32 %v554, 0.0
    %v572 = vmax.f32 %v505, 0.0
    %v573 = vmax.f32 %v507, 0.0
    %v574 = vmax.f32 %v556, 0.0
    %v575 = vmax.f32 %v558, 0.0
    %v576 = vmax.f32 %v511, 0.0
    %v577 = vmax.f32 %v513, 0.0
    %v578 = vmax.f32 %v562, 0.0
    %v579 = vmax.f32 %v564, 0.0
    %v580 = vld [vmem:[%s3] sm:$0xf]
    %v582 = vlaneseq
    %v583 = vshrl.u32 %v582, 7
    %v584 = vsub.s32 0, %v583
    %v585 = vrot.slane %v580, %v584
    %v586 = vlaneseq
    %v587 = vshrl.u32 %v586, 7
    %v588 = vsub.s32 1, %v587
    %v589 = vrot.slane %v580, %v588
    %v590 = vlaneseq
    %v591 = vshrl.u32 %v590, 7
    %v592 = vsub.s32 2, %v591
    %v593 = vrot.slane %v580, %v592
    %v594 = vlaneseq
    %v595 = vshrl.u32 %v594, 7
    %v596 = vsub.s32 3, %v595
    %v597 = vrot.slane %v580, %v596
    %v602 = vmul.f32 %v568, %v585
    %v603 = vmul.f32 %v569, %v589
    %v604 = vmul.f32 %v570, %v593
    %v605 = vmul.f32 %v571, %v597
    %v606 = vmul.f32 %v572, %v585
    %v607 = vmul.f32 %v573, %v589
    %v608 = vmul.f32 %v574, %v593
    %v609 = vmul.f32 %v575, %v597
    %v610 = vmul.f32 %v576, %v585
    %v611 = vmul.f32 %v577, %v589
    %v612 = vmul.f32 %v578, %v593
    %v613 = vmul.f32 %v579, %v597
    %v614 = vadd.f32 %v602, %v603
    %v615 = vadd.f32 %v614, %v604
    %v616 = vadd.f32 %v615, %v605
    %617 = vadd.xlane.f32.xlu0 %v616
    %v618 = vpop.xlane.xlu0 %617
    %v619 = vadd.f32 %v606, %v607
    %v620 = vadd.f32 %v619, %v608
    %v621 = vadd.f32 %v620, %v609
    %622 = vadd.xlane.f32.xlu0 %v621
    %v623 = vpop.xlane.xlu0 %622
    %vm624 = vcmask 1043456
    %v625 = vsel %vm624, %v610, 0.0
    %v626 = vsel %vm624, %v611, 0.0
    %v627 = vadd.f32 %v625, %v626
    %v628 = vsel %vm624, %v612, 0.0
    %v629 = vadd.f32 %v627, %v628
    %v630 = vsel %vm624, %v613, 0.0
    %v631 = vadd.f32 %v629, %v630
    %632 = vadd.xlane.f32.xlu0 %v631
    %v633 = vpop.xlane.xlu0 %632
    %s634 = sld [smem:[#allocation2]]
    %v635 = vstv %s634
    %v636 = vadd.f32 %v618, %v635
    %v637 = vadd.f32 %v623, %v635
    %v638 = vadd.f32 %v633, %v635
    %v639 = vmax.f32 %v636, 0.0
    %v640 = vmax.f32 %v637, 0.0
    %v641 = vmax.f32 %v638, 0.0
    %v642 = vand.u32 2147483647, %v636
    %v643 = vand.u32 2147483647, %v637
    %v644 = vand.u32 2147483647, %v638
    %v645 = vsub.f32 0.0, %v642
    %v646 = vsub.f32 0.0, %v643
    %v647 = vsub.f32 0.0, %v644
    %v648 = vmul.f32 %v645, 1.442695
    %v649 = vpow.pop %v648
    %v650 = vmul.f32 %v646, 1.442695
    %v651 = vpow.pop %v650
    %v652 = vmul.f32 %v647, 1.442695
    %v653 = vpow.pop %v652
    %v654 = vadd.f32 %v649, 1.0
    %v655 = vlog2.pop %v654
    %v656 = vmul.f32 %v655, 0.6931472
    %v657 = vmul.f32 -0.5, %v649
    %v658 = vadd.f32 %v657, 1.0
    %v659 = vmul.f32 %v658, %v649
    %v660 = vand.u32 2147483647, %v649
    %vm661 = vcmp.lt.f32.partialorder %v660, 0.0004427343
    %v662 = vsel %vm661, %v659, %v656
    %v663 = vadd.f32 %v651, 1.0
    %v664 = vlog2.pop %v663
    %v665 = vmul.f32 %v664, 0.6931472
    %v666 = vmul.f32 -0.5, %v651
    %v667 = vadd.f32 %v666, 1.0
    %v668 = vmul.f32 %v667, %v651
    %v669 = vand.u32 2147483647, %v651
    %vm670 = vcmp.lt.f32.partialorder %v669, 0.0004427343
    %v671 = vsel %vm670, %v668, %v665
    %v672 = vadd.f32 %v653, 1.0
    %v673 = vlog2.pop %v672
    %v674 = vmul.f32 %v673, 0.6931472
    %v675 = vmul.f32 -0.5, %v653
    %v676 = vadd.f32 %v675, 1.0
    %v677 = vmul.f32 %v676, %v653
    %v678 = vand.u32 2147483647, %v653
    %vm679 = vcmp.lt.f32.partialorder %v678, 0.0004427343
    %v680 = vsel %vm679, %v677, %v674
    %v681 = vadd.f32 %v639, %v662
    %v682 = vadd.f32 %v640, %v671
    %v683 = vadd.f32 %v641, %v680
    %v687 = vlaneseq
    %v688 = vand.u32 %v687, 127
    %v689 = vlaneseq
    %v690 = vshrl.u32 %v689, 7
    %v691 = vsub.s32 %v688, %v690
    %v692 = vrot.slane %v681, %v691
    %v693 = vadd.s32 %v688, 4294967288
    %v694 = vlaneseq
    %v695 = vshrl.u32 %v694, 7
    %v696 = vsub.s32 %v693, %v695
    %v697 = vrot.slane %v682, %v696
    %vm698 = vcmask 130112
    %v699 = vsel %vm698, %v697, %v692
    %v700 = vadd.s32 %v688, 4294967280
    %v701 = vlaneseq
    %v702 = vshrl.u32 %v701, 7
    %v703 = vsub.s32 %v700, %v702
    %v704 = vrot.slane %v683, %v703
    %vm705 = vcmask 195712
    %v706 = vsel %vm705, %v704, %v699
    %vm708 = vcmask 155648
    %709 = vst.msk [vmem:[#allocation8] sm:$0x1] %vm708, %v706
    // Predicated region
    $region30: #{tpu_custom_call.1} parent=1 // pred_check
      _
    $region31: #{tpu_custom_call.1} parent=1 // pred_check_branch
      %711 = sbr.rel (0) target = $region33
    $region32: #{tpu_custom_call.1} parent=1 // pred_region
      %s713 = ssub.s32 16, 16
      %714 = vsyncadd [#allocation5], %s713
      %s716 = sshll.u32 [#allocation8], 4
      %s717 = int_to_ptr.vmem [resolvable:$true] %s716
      %719 = dma.vmem_to_hbm [thread:$0]  %s717, 16, %s5, [#allocation5]
    $region33: #{tpu_custom_call.1} parent=1 // pred_fallthru
      _
    // Predicated region
    $region34: #{tpu_custom_call.1} parent=1 // pred_check
      _
    $region35: #{tpu_custom_call.1} parent=1 // pred_check_branch
      %721 = sbr.rel (0) target = $region37
    $region36: #{tpu_custom_call.1} parent=1 // pred_region
      %722 = dma.done [#allocation5], 16
    $region37: #{tpu_custom_call.1} parent=1 // pred_fallthru
      _
    %723 = vsyncpa [#allocation4], 1
    %724 = vsyncpa [#allocation7], 1
    %725 = vsyncpa [#allocation5], 1

</llo_original>
